<compile_context>
chip_gen: v7x
topology: tpu7x:2x2x1
jax: 0.10.0
libtpu: 0.0.40
codegen_flags: <defaults>
</compile_context>

<pallas_src>
import functools

import jax
import jax.numpy as jnp
from jax.experimental import pallas as pl
from jax.experimental.pallas import tpu as pltpu


def _softplus(x):
    return jnp.logaddexp(x, 0.0)


def _round_up(v, m):
    return (v + m - 1) // m * m


def _cgcnn_kernel(src_ref, dst_ref,                    # (te, 1) int32 index tiles (VMEM)
                  x_ref, e_ref,                        # (N, Hp) nodes, (te, De) edge feats
                  wsrc_ref, wdst_ref, we_ref, b_ref,   # BN-folded, padded weights / bias
                  out_ref,                             # (N, Hp) output
                  p_ref, acc_ref,                      # VMEM scratch
                  *, num_nodes, h_pad):
    pid = pl.program_id(0)
    te = src_ref.shape[0]

    @pl.when(pid == 0)
    def _init():
        # Project every node through the (BN-folded) src/dst weights exactly once and
        # keep the result resident:  P[0:N] = x @ W_src,  P[N:2N] = x @ W_dst.
        x = x_ref[...]
        p_ref[:num_nodes, :] = jnp.dot(x, wsrc_ref[...],
                                       preferred_element_type=jnp.float32)
        p_ref[num_nodes:, :] = jnp.dot(x, wdst_ref[...],
                                       preferred_element_type=jnp.float32)
        acc_ref[...] = jnp.zeros_like(acc_ref)

    src = src_ref[...]                                  # (te, 1) int32
    dst = dst_ref[...]                                  # (te, 1) int32  (padded edges: N)

    # Two-hot gather matrix: row i selects P[src[i]] and P[N + dst[i]].
    col2 = jax.lax.broadcasted_iota(jnp.int32, (te, 2 * num_nodes), 1)
    oh_pair = jnp.logical_or(col2 == src, col2 == dst + num_nodes).astype(jnp.float32)

    # Fused gather + Linear (+ folded BatchNorm):  z = P[src] + P[dst] + e @ W_e + b
    z = (jnp.dot(oh_pair, p_ref[...], preferred_element_type=jnp.float32)
         + jnp.dot(e_ref[...], we_ref[...], preferred_element_type=jnp.float32)
         + b_ref[...])                                  # (te, 2*Hp)

    # Gate/message halves are each padded to Hp (multiple of 128) -> vreg-aligned split
    # and full-lane sigmoid/softplus/mul. Padded columns produce junk but are never
    # read back (wrapper slices [:, :H]).
    gated = jax.nn.sigmoid(z[:, :h_pad])
    msg = _softplus(z[:, h_pad:])
    message = gated * msg                               # (te, Hp)

    # Vectorized scatter-add (segment-sum) on the MXU: one-hot of dst, contracted over
    # the edge dimension.  Padded edges carry dst == N -> all-zero one-hot row.
    coln = jax.lax.broadcasted_iota(jnp.int32, (te, num_nodes), 1)
    oh_dst = (coln == dst).astype(jnp.float32)          # (te, N)
    acc_ref[...] += jax.lax.dot_general(
        oh_dst, message,
        dimension_numbers=(((0,), (0,)), ((), ())),
        preferred_element_type=jnp.float32)             # (N, Hp)

    @pl.when(pid == pl.num_programs(0) - 1)
    def _finalize():
        out_ref[...] = _softplus(x_ref[...] + acc_ref[...]).astype(out_ref.dtype)


def cgcnn_layer(node_feats, edge_feats, src, dst, params, eps=1e-5, edge_tile=1024):
    """Pallas-backed CGCNNLayer forward (eval-mode BatchNorm).

    node_feats: (N, H) f32, edge_feats: (E, De) f32, src/dst: (E,) int32.
    Returns (N, H) f32.
    """
    N, H = node_feats.shape
    E, De = edge_feats.shape
    Hp = _round_up(H, 128)                               # lane-dense feature width

    W, b = params["W"], params["b"]                      # W: (2H, 2H+De), (out, in) layout
    gamma, beta = params["gamma"], params["beta"]
    mean, var = params["mean"], params["var"]

    # Fold eval-mode BatchNorm into the linear layer (per output channel).
    scale = gamma / jnp.sqrt(var + eps)                  # (2H,)
    Wf = W * scale[:, None]
    bf = (b - mean) * scale + beta

    def split_pad(w_half, b_half):
        # w_half: (H, 2H+De) rows of the folded weight for one half (gate or msg).
        w_s = jnp.pad(w_half[:, :H].T, ((0, Hp - H), (0, Hp - H)))       # (Hp, Hp)
        w_d = jnp.pad(w_half[:, H:2 * H].T, ((0, Hp - H), (0, Hp - H)))  # (Hp, Hp)
        w_e = jnp.pad(w_half[:, 2 * H:].T, ((0, 0), (0, Hp - H)))        # (De, Hp)
        b_p = jnp.pad(b_half, (0, Hp - H))                               # (Hp,)
        return w_s, w_d, w_e, b_p

    wsg, wdg, weg, bg = split_pad(Wf[:H], bf[:H])        # gate half
    wsm, wdm, wem, bm = split_pad(Wf[H:], bf[H:])        # message half

    w_src = jnp.concatenate([wsg, wsm], axis=1)          # (Hp, 2*Hp)
    w_dst = jnp.concatenate([wdg, wdm], axis=1)          # (Hp, 2*Hp)
    w_e = jnp.concatenate([weg, wem], axis=1)            # (De, 2*Hp)
    b_row = jnp.concatenate([bg, bm]).reshape(1, 2 * Hp)

    x_pad = jnp.pad(node_feats.astype(jnp.float32), ((0, 0), (0, Hp - H)))

    te = min(edge_tile, _round_up(E, 8))
    e_pad = _round_up(E, te)
    num_tiles = e_pad // te

    src = src.astype(jnp.int32)
    dst = dst.astype(jnp.int32)
    edge_feats = edge_feats.astype(jnp.float32)
    if e_pad != E:
        edge_feats = jnp.pad(edge_feats, ((0, e_pad - E), (0, 0)))
        src = jnp.pad(src, (0, e_pad - E))                        # padded src -> node 0 (harmless)
        dst = jnp.pad(dst, (0, e_pad - E), constant_values=N)     # sentinel N -> zero scatter row
    src2d = src.reshape(e_pad, 1)
    dst2d = dst.reshape(e_pad, 1)

    kernel = functools.partial(_cgcnn_kernel, num_nodes=N, h_pad=Hp)

    # Resident-footprint-based VMEM limit (bytes).  Keep headroom; clamp to what the
    # smaller v7x VMEM tolerates at the low end and ~100 MiB at the high end.
    vmem_est = 4 * (
        6 * N * Hp                      # x, out (dbl-buffered) + acc
        + 4 * N * Hp                    # P scratch (2N, 2*Hp)
        + 2 * (2 * Hp * 2 * Hp)         # w_src + w_dst
        + 2 * (De + 1) * 2 * Hp         # w_e + bias
        + 4 * te * (De + 2))            # edge-feat + index tiles (dbl-buffered)
    vmem_limit = int(min(max(2 * vmem_est, 32 * 1024 * 1024), 100 * 1024 * 1024))

    grid_spec = pltpu.PrefetchScalarGridSpec(
        num_scalar_prefetch=0,
        grid=(num_tiles,),
        in_specs=[
            pl.BlockSpec((te, 1), lambda i: (i, 0)),            # src indices (tiled)
            pl.BlockSpec((te, 1), lambda i: (i, 0)),            # dst indices (tiled)
            pl.BlockSpec((N, Hp), lambda i: (0, 0)),            # node feats (resident)
            pl.BlockSpec((te, De), lambda i: (i, 0)),           # edge feats (tiled)
            pl.BlockSpec((Hp, 2 * Hp), lambda i: (0, 0)),       # w_src (resident)
            pl.BlockSpec((Hp, 2 * Hp), lambda i: (0, 0)),       # w_dst (resident)
            pl.BlockSpec((De, 2 * Hp), lambda i: (0, 0)),       # w_e  (resident)
            pl.BlockSpec((1, 2 * Hp), lambda i: (0, 0)),        # folded bias row
        ],
        out_specs=pl.BlockSpec((N, Hp), lambda i: (0, 0)),
        scratch_shapes=[
            pltpu.VMEM((2 * N, 2 * Hp), jnp.float32),   # P = [x@W_src ; x@W_dst]
            pltpu.VMEM((N, Hp), jnp.float32),           # per-node accumulator
        ],
    )

    out_pad = pl.pallas_call(
        kernel,
        out_shape=jax.ShapeDtypeStruct((N, Hp), node_feats.dtype),
        grid_spec=grid_spec,
        compiler_params=pltpu.CompilerParams(
            dimension_semantics=("arbitrary",),          # edge axis is a reduction
            vmem_limit_bytes=vmem_limit,
        ),
    )(src2d, dst2d, x_pad, edge_feats, w_src, w_dst, w_e, b_row)

    return out_pad[:, :H]


def cgcnn_layer_reference(node_feats, edge_feats, src, dst, params, eps=1e-5):
    """Pure-JAX reference matching the PyTorch module (eval-mode BN)."""
    N, H = node_feats.shape
    z = jnp.concatenate([node_feats[src], node_feats[dst], edge_feats], axis=1)
    z = jnp.dot(z, params["W"].T, precision=jax.lax.Precision.HIGHEST) + params["b"]
    z = (z - params["mean"]) / jnp.sqrt(params["var"] + eps) * params["gamma"] + params["beta"]
    gated = jax.nn.sigmoid(z[:, :H])
    msg = jax.nn.softplus(z[:, H:])
    message = gated * msg
    agg = jax.ops.segment_sum(message, dst, num_segments=N)
    return jax.nn.softplus(node_feats + agg)


if __name__ == "__main__":
    # Small shapes consistent with the module:
    N = 8           # nodes
    E = 16          # edges
    H = 32          # hidden_node_dim
    De = 16         # edge_dim
    z_dim = 2 * H + De
    out_dim = 2 * H

    key = jax.random.PRNGKey(0)
    k_x, k_e, k_src, k_dst, k_w, k_b = jax.random.split(key, 6)

    node_feats = jax.random.normal(k_x, (N, H), dtype=jnp.float32)
    edge_feats = jax.random.normal(k_e, (E, De), dtype=jnp.float32)
    src = jax.random.randint(k_src, (E,), 0, N, dtype=jnp.int32)
    dst = jax.random.randint(k_dst, (E,), 0, N, dtype=jnp.int32)

    # Deterministic parameter init (nn.Linear-style uniform; BN defaults).
    bound = 1.0 / jnp.sqrt(jnp.float32(z_dim))
    params = {
        "W": jax.random.uniform(k_w, (out_dim, z_dim), jnp.float32, -bound, bound),
        "b": jax.random.uniform(k_b, (out_dim,), jnp.float32, -bound, bound),
        "gamma": jnp.ones((out_dim,), jnp.float32),
        "beta": jnp.zeros((out_dim,), jnp.float32),
        "mean": jnp.zeros((out_dim,), jnp.float32),
        "var": jnp.ones((out_dim,), jnp.float32),
    }

    out = cgcnn_layer(node_feats, edge_feats, src, dst, params)
    out = jax.block_until_ready(out)

    ref = cgcnn_layer_reference(node_feats, edge_feats, src, dst, params)
    assert out.shape == (N, H)
    assert jnp.allclose(out, ref, atol=2e-3, rtol=2e-3), (
        f"max abs err {jnp.max(jnp.abs(out - ref))}")

    print("KERNEL_OK")
</pallas_src>

<mosaic_0001>
module attributes {stable_mosaic.version = 11 : i64} {
  func.func @_cgcnn_kernel(%arg0: i32, %arg1: memref<16x1xi32, #tpu.memory_space<vmem>>, %arg2: memref<16x1xi32, #tpu.memory_space<vmem>>, %arg3: memref<8x128xf32, #tpu.memory_space<vmem>>, %arg4: memref<16x16xf32, #tpu.memory_space<vmem>>, %arg5: memref<128x256xf32, #tpu.memory_space<vmem>>, %arg6: memref<128x256xf32, #tpu.memory_space<vmem>>, %arg7: memref<16x256xf32, #tpu.memory_space<vmem>>, %arg8: memref<1x256xf32, #tpu.memory_space<vmem>>, %arg9: memref<8x128xf32, #tpu.memory_space<vmem>>, %arg10: memref<16x256xf32, #tpu.memory_space<vmem>>, %arg11: memref<8x128xf32, #tpu.memory_space<vmem>>) attributes {dimension_semantics = [#tpu.dimension_semantics<arbitrary>], iteration_bounds = array<i64: 1>, scalar_prefetch = 0 : i64, scratch_operands = 2 : i64, tpu.core_type = #tpu.core_type<tc>, window_params = [{transform_indices = @transform_0, window_bounds = array<i64: 16, 1>}, {transform_indices = @transform_1, window_bounds = array<i64: 16, 1>}, {pipeline_mode = #tpu.pipeline_mode<synchronous>, transform_indices = @transform_2, window_bounds = array<i64: 8, 128>}, {transform_indices = @transform_3, window_bounds = array<i64: 16, 16>}, {pipeline_mode = #tpu.pipeline_mode<synchronous>, transform_indices = @transform_4, window_bounds = array<i64: 128, 256>}, {pipeline_mode = #tpu.pipeline_mode<synchronous>, transform_indices = @transform_5, window_bounds = array<i64: 128, 256>}, {pipeline_mode = #tpu.pipeline_mode<synchronous>, transform_indices = @transform_6, window_bounds = array<i64: 16, 256>}, {pipeline_mode = #tpu.pipeline_mode<synchronous>, transform_indices = @transform_7, window_bounds = array<i64: 1, 256>}, {pipeline_mode = #tpu.pipeline_mode<synchronous>, transform_indices = @transform_8, window_bounds = array<i64: 8, 128>}]} {
    %c0_i32 = arith.constant 0 : i32
    %0 = arith.cmpi eq, %arg0, %c0_i32 : i32
    %1 = arith.extui %0 : i1 to i32
    %c0_i32_0 = arith.constant 0 : i32
    %2 = arith.cmpi ne, %1, %c0_i32_0 : i32
    scf.if %2 {
      %c0_23 = arith.constant 0 : index
      %c0_24 = arith.constant 0 : index
      %58 = vector.load %arg3[%c0_23, %c0_24] : memref<8x128xf32, #tpu.memory_space<vmem>>, vector<8x128xf32>
      %c0_25 = arith.constant 0 : index
      %c0_26 = arith.constant 0 : index
      %59 = vector.load %arg5[%c0_25, %c0_26] : memref<128x256xf32, #tpu.memory_space<vmem>>, vector<128x256xf32>
      %cst_27 = arith.constant dense<0.000000e+00> : vector<8x256xf32>
      %60 = tpu.matmul %58, %59, %cst_27 {dimension_numbers = #tpu.dot_dimension_numbers<[1], [0], [0], [1], [0, 0, 1, 1], [], []>} : vector<8x128xf32>, vector<128x256xf32>, vector<8x256xf32> -> vector<8x256xf32>
      %c0_28 = arith.constant 0 : index
      %c0_29 = arith.constant 0 : index
      %61 = vector.load %arg10[%c0_28, %c0_29] : memref<16x256xf32, #tpu.memory_space<vmem>>, vector<8x256xf32>
      tpu.vector_store %arg10[%c0_28, %c0_29], %60 {strides = array<i32>} : memref<16x256xf32, #tpu.memory_space<vmem>>, vector<8x256xf32>,
      %c0_30 = arith.constant 0 : index
      %c0_31 = arith.constant 0 : index
      %62 = vector.load %arg6[%c0_30, %c0_31] : memref<128x256xf32, #tpu.memory_space<vmem>>, vector<128x256xf32>
      %cst_32 = arith.constant dense<0.000000e+00> : vector<8x256xf32>
      %63 = tpu.matmul %58, %62, %cst_32 {dimension_numbers = #tpu.dot_dimension_numbers<[1], [0], [0], [1], [0, 0, 1, 1], [], []>} : vector<8x128xf32>, vector<128x256xf32>, vector<8x256xf32> -> vector<8x256xf32>
      %c8 = arith.constant 8 : index
      %c0_33 = arith.constant 0 : index
      %64 = vector.load %arg10[%c8, %c0_33] : memref<16x256xf32, #tpu.memory_space<vmem>>, vector<8x256xf32>
      tpu.vector_store %arg10[%c8, %c0_33], %63 {strides = array<i32>} : memref<16x256xf32, #tpu.memory_space<vmem>>, vector<8x256xf32>,
      %cst_34 = arith.constant 0.000000e+00 : f32
      %65 = vector.broadcast %cst_34 : f32 to vector<8x128xf32>
      %c0_35 = arith.constant 0 : index
      %c0_36 = arith.constant 0 : index
      %66 = vector.load %arg11[%c0_35, %c0_36] : memref<8x128xf32, #tpu.memory_space<vmem>>, vector<8x128xf32>
      tpu.vector_store %arg11[%c0_35, %c0_36], %65 {strides = array<i32>} : memref<8x128xf32, #tpu.memory_space<vmem>>, vector<8x128xf32>,
    } else {
    }
    %c0 = arith.constant 0 : index
    %c0_1 = arith.constant 0 : index
    %3 = vector.load %arg1[%c0, %c0_1] : memref<16x1xi32, #tpu.memory_space<vmem>>, vector<16x1xi32>
    %c0_2 = arith.constant 0 : index
    %c0_3 = arith.constant 0 : index
    %4 = vector.load %arg2[%c0_2, %c0_3] : memref<16x1xi32, #tpu.memory_space<vmem>>, vector<16x1xi32>
    %5 = tpu.iota {dimensions = array<i32: 1>} : vector<16x16xi32>
    %6 = vector.broadcast %3 : vector<16x1xi32> to vector<16x16xi32>
    %7 = arith.cmpi eq, %5, %6 : vector<16x16xi32>
    %c8_i32 = arith.constant 8 : i32
    %8 = vector.broadcast %c8_i32 : i32 to vector<16x1xi32>
    %9 = arith.addi %4, %8 : vector<16x1xi32>
    %10 = vector.broadcast %9 : vector<16x1xi32> to vector<16x16xi32>
    %11 = arith.cmpi eq, %5, %10 : vector<16x16xi32>
    %12 = arith.ori %7, %11 : vector<16x16xi1>
    %13 = arith.extui %12 : vector<16x16xi1> to vector<16x16xi32>
    %14 = arith.sitofp %13 : vector<16x16xi32> to vector<16x16xf32>
    %c0_4 = arith.constant 0 : index
    %c0_5 = arith.constant 0 : index
    %15 = vector.load %arg10[%c0_4, %c0_5] : memref<16x256xf32, #tpu.memory_space<vmem>>, vector<16x256xf32>
    %cst = arith.constant dense<0.000000e+00> : vector<16x256xf32>
    %16 = tpu.matmul %14, %15, %cst {dimension_numbers = #tpu.dot_dimension_numbers<[1], [0], [0], [1], [0, 0, 1, 1], [], []>} : vector<16x16xf32>, vector<16x256xf32>, vector<16x256xf32> -> vector<16x256xf32>
    %c0_6 = arith.constant 0 : index
    %c0_7 = arith.constant 0 : index
    %17 = vector.load %arg4[%c0_6, %c0_7] : memref<16x16xf32, #tpu.memory_space<vmem>>, vector<16x16xf32>
    %c0_8 = arith.constant 0 : index
    %c0_9 = arith.constant 0 : index
    %18 = vector.load %arg7[%c0_8, %c0_9] : memref<16x256xf32, #tpu.memory_space<vmem>>, vector<16x256xf32>
    %cst_10 = arith.constant dense<0.000000e+00> : vector<16x256xf32>
    %19 = tpu.matmul %17, %18, %cst_10 {dimension_numbers = #tpu.dot_dimension_numbers<[1], [0], [0], [1], [0, 0, 1, 1], [], []>} : vector<16x16xf32>, vector<16x256xf32>, vector<16x256xf32> -> vector<16x256xf32>
    %20 = arith.addf %16, %19 : vector<16x256xf32>
    %c0_11 = arith.constant 0 : index
    %c0_12 = arith.constant 0 : index
    %21 = vector.load %arg8[%c0_11, %c0_12] : memref<1x256xf32, #tpu.memory_space<vmem>>, vector<1x256xf32>
    %22 = vector.broadcast %21 : vector<1x256xf32> to vector<16x256xf32>
    %23 = arith.addf %20, %22 : vector<16x256xf32>
    %24 = vector.extract_strided_slice %23 {offsets = [0, 0], sizes = [16, 128], strides = [1, 1]} : vector<16x256xf32> to vector<16x128xf32>
    %25 = arith.negf %24 : vector<16x128xf32>
    %26 = math.exp %25 : vector<16x128xf32>
    %cst_13 = arith.constant 1.000000e+00 : f32
    %27 = vector.broadcast %cst_13 : f32 to vector<16x128xf32>
    %28 = arith.addf %27, %26 : vector<16x128xf32>
    %29 = arith.divf %27, %28 : vector<16x128xf32>
    %30 = vector.extract_strided_slice %23 {offsets = [0, 128], sizes = [16, 128], strides = [1, 1]} : vector<16x256xf32> to vector<16x128xf32>
    %cst_14 = arith.constant 0.000000e+00 : f32
    %31 = vector.broadcast %cst_14 : f32 to vector<16x128xf32>
    %32 = arith.maximumf %30, %31 : vector<16x128xf32>
    %33 = vector.broadcast %cst_14 : f32 to vector<16x128xf32>
    %34 = arith.subf %30, %33 : vector<16x128xf32>
    %35 = arith.cmpf one, %34, %34 : vector<16x128xf32>
    %36 = vector.broadcast %cst_14 : f32 to vector<16x128xf32>
    %37 = arith.addf %30, %36 : vector<16x128xf32>
    %38 = math.absf %34 : vector<16x128xf32>
    %cst_15 = arith.constant 0.000000e+00 : f32
    %39 = vector.broadcast %cst_15 : f32 to vector<16x128xf32>
    %40 = arith.subf %39, %38 : vector<16x128xf32>
    %41 = math.exp %40 : vector<16x128xf32>
    %42 = math.log1p %41 : vector<16x128xf32>
    %43 = arith.addf %32, %42 : vector<16x128xf32>
    %44 = arith.select %35, %37, %43 : vector<16x128xi1>, vector<16x128xf32>
    %45 = arith.mulf %29, %44 : vector<16x128xf32>
    %46 = tpu.iota {dimensions = array<i32: 1>} : vector<16x8xi32>
    %47 = vector.broadcast %4 : vector<16x1xi32> to vector<16x8xi32>
    %48 = arith.cmpi eq, %46, %47 : vector<16x8xi32>
    %49 = arith.extui %48 : vector<16x8xi1> to vector<16x8xi32>
    %50 = arith.sitofp %49 : vector<16x8xi32> to vector<16x8xf32>
    %c0_16 = arith.constant 0 : index
    %c0_17 = arith.constant 0 : index
    %51 = vector.load %arg11[%c0_16, %c0_17] : memref<8x128xf32, #tpu.memory_space<vmem>>, vector<8x128xf32>
    %cst_18 = arith.constant dense<0.000000e+00> : vector<8x128xf32>
    %52 = tpu.matmul %50, %45, %cst_18 {dimension_numbers = #tpu.dot_dimension_numbers<[0], [0], [1], [1], [0, 1, 1, 1], [], []>} : vector<16x8xf32>, vector<16x128xf32>, vector<8x128xf32> -> vector<8x128xf32>
    %53 = arith.addf %51, %52 : vector<8x128xf32>
    %c0_19 = arith.constant 0 : index
    %c0_20 = arith.constant 0 : index
    %54 = vector.load %arg11[%c0_19, %c0_20] : memref<8x128xf32, #tpu.memory_space<vmem>>, vector<8x128xf32>
    tpu.vector_store %arg11[%c0_19, %c0_20], %53 {strides = array<i32>} : memref<8x128xf32, #tpu.memory_space<vmem>>, vector<8x128xf32>,
    %c0_i32_21 = arith.constant 0 : i32
    %55 = arith.cmpi eq, %arg0, %c0_i32_21 : i32
    %56 = arith.extui %55 : i1 to i32
    %c0_i32_22 = arith.constant 0 : i32
    %57 = arith.cmpi ne, %56, %c0_i32_22 : i32
    scf.if %57 {
      %c0_23 = arith.constant 0 : index
      %c0_24 = arith.constant 0 : index
      %58 = vector.load %arg3[%c0_23, %c0_24] : memref<8x128xf32, #tpu.memory_space<vmem>>, vector<8x128xf32>
      %c0_25 = arith.constant 0 : index
      %c0_26 = arith.constant 0 : index
      %59 = vector.load %arg11[%c0_25, %c0_26] : memref<8x128xf32, #tpu.memory_space<vmem>>, vector<8x128xf32>
      %60 = arith.addf %58, %59 : vector<8x128xf32>
      %cst_27 = arith.constant 0.000000e+00 : f32
      %61 = vector.broadcast %cst_27 : f32 to vector<8x128xf32>
      %62 = arith.maximumf %60, %61 : vector<8x128xf32>
      %63 = vector.broadcast %cst_27 : f32 to vector<8x128xf32>
      %64 = arith.subf %60, %63 : vector<8x128xf32>
      %65 = arith.cmpf one, %64, %64 : vector<8x128xf32>
      %66 = vector.broadcast %cst_27 : f32 to vector<8x128xf32>
      %67 = arith.addf %60, %66 : vector<8x128xf32>
      %68 = math.absf %64 : vector<8x128xf32>
      %cst_28 = arith.constant 0.000000e+00 : f32
      %69 = vector.broadcast %cst_28 : f32 to vector<8x128xf32>
      %70 = arith.subf %69, %68 : vector<8x128xf32>
      %71 = math.exp %70 : vector<8x128xf32>
      %72 = math.log1p %71 : vector<8x128xf32>
      %73 = arith.addf %62, %72 : vector<8x128xf32>
      %74 = arith.select %65, %67, %73 : vector<8x128xi1>, vector<8x128xf32>
      %c0_29 = arith.constant 0 : index
      %c0_30 = arith.constant 0 : index
      %75 = vector.load %arg9[%c0_29, %c0_30] : memref<8x128xf32, #tpu.memory_space<vmem>>, vector<8x128xf32>
      tpu.vector_store %arg9[%c0_29, %c0_30], %74 {strides = array<i32>} : memref<8x128xf32, #tpu.memory_space<vmem>>, vector<8x128xf32>,
    } else {
    }
    return
  }
  func.func @transform_0(%arg0: i32) -> (i32, i32) {
    %c0_i32 = arith.constant 0 : i32
    %c0_i32_0 = arith.constant 0 : i32
    return %arg0, %c0_i32 : i32, i32
  }
  func.func @transform_1(%arg0: i32) -> (i32, i32) {
    %c0_i32 = arith.constant 0 : i32
    %c0_i32_0 = arith.constant 0 : i32
    return %arg0, %c0_i32 : i32, i32
  }
  func.func @transform_2(%arg0: i32) -> (i32, i32) {
    %c0_i32 = arith.constant 0 : i32
    %c0_i32_0 = arith.constant 0 : i32
    %c0_i32_1 = arith.constant 0 : i32
    return %c0_i32, %c0_i32_0 : i32, i32
  }
  func.func @transform_3(%arg0: i32) -> (i32, i32) {
    %c0_i32 = arith.constant 0 : i32
    %c0_i32_0 = arith.constant 0 : i32
    return %arg0, %c0_i32 : i32, i32
  }
  func.func @transform_4(%arg0: i32) -> (i32, i32) {
    %c0_i32 = arith.constant 0 : i32
    %c0_i32_0 = arith.constant 0 : i32
    %c0_i32_1 = arith.constant 0 : i32
    return %c0_i32, %c0_i32_0 : i32, i32
  }
  func.func @transform_5(%arg0: i32) -> (i32, i32) {
    %c0_i32 = arith.constant 0 : i32
    %c0_i32_0 = arith.constant 0 : i32
    %c0_i32_1 = arith.constant 0 : i32
    return %c0_i32, %c0_i32_0 : i32, i32
  }
  func.func @transform_6(%arg0: i32) -> (i32, i32) {
    %c0_i32 = arith.constant 0 : i32
    %c0_i32_0 = arith.constant 0 : i32
    %c0_i32_1 = arith.constant 0 : i32
    return %c0_i32, %c0_i32_0 : i32, i32
  }
  func.func @transform_7(%arg0: i32) -> (i32, i32) {
    %c0_i32 = arith.constant 0 : i32
    %c0_i32_0 = arith.constant 0 : i32
    %c0_i32_1 = arith.constant 0 : i32
    return %c0_i32, %c0_i32_0 : i32, i32
  }
  func.func @transform_8(%arg0: i32) -> (i32, i32) {
    %c0_i32 = arith.constant 0 : i32
    %c0_i32_0 = arith.constant 0 : i32
    %c0_i32_1 = arith.constant 0 : i32
    return %c0_i32, %c0_i32_0 : i32, i32
  }
}

</mosaic_0001>

<llo_original>
// kernel: tpu_custom_call.1
$region0: #{tpu_custom_call.1}
  #allocation0 [shape = 'u32[]', space=smem, size = 0x4, offset = 0x4, fixed_abs, tag = 'smem constant byte address 0x4 - core index']
  #allocation1 [shape = 'u32[144,128]{1,0:T(1,128)}', space=vmem, size = 0x12000, scoped, tag = 'internal scratch']
  #allocation2 [shape = 'f32[16,256]{1,0:T(8,128)}', space=vmem, size = 0x4000, scoped, tag = 'scratch operand']
  #allocation3 [shape = 'f32[8,128]{1,0:T(8,128)}', space=vmem, size = 0x1000, scoped, tag = 'scratch operand']
  %s0 = inlined_call_operand.vmem [shape: s32[16,1], index: 0, kind: input, shape index: {}]
  %s1 = inlined_call_operand.vmem [shape: s32[16,1], index: 1, kind: input, shape index: {}]
  %s2 = inlined_call_operand.vmem [shape: f32[8,128], index: 2, kind: input, shape index: {}]
  %s3 = inlined_call_operand.vmem [shape: f32[16,16], index: 3, kind: input, shape index: {}]
  %s4 = inlined_call_operand.hbm [shape: f32[128,256], index: 4, kind: input, shape index: {}]
  %s5 = inlined_call_operand.hbm [shape: f32[128,256], index: 5, kind: input, shape index: {}]
  %s6 = inlined_call_operand.vmem [shape: f32[16,256], index: 6, kind: input, shape index: {}]
  %s7 = inlined_call_operand.vmem [shape: f32[1,256], index: 7, kind: input, shape index: {}]
  %s8 = inlined_call_operand.hbm [shape: f32[8,128], index: 8, kind: output, shape index: {}]
  %s9 = sld [smem:[#allocation0]]
  $region58: #{tpu_custom_call.1} parent=0
    _
  %s11 = ssub.s32 1, %s9
  %s12 = scalar_select 0, %s11, %s9
  $region1: #{tpu_custom_call.1} parent=0
    #allocation4 [shape = 'u8[131072]{0}', space=vmem, size = 0x20000, scoped, tag = 'input window, operand 4, single buffered']
    #allocation5 [shape = 's32[1]{0}', space=sflag, size = 0x4, scoped, tag = 'scoped memory for tpu_custom_call.1']
    #allocation6 [shape = 's32[1]{0}', space=sflag, size = 0x4, scoped, tag = 'scoped memory for tpu_custom_call.1']
    #allocation7 [shape = 'u8[131072]{0}', space=vmem, size = 0x20000, scoped, tag = 'input window, operand 5, single buffered']
    #allocation8 [shape = 's32[1]{0}', space=sflag, size = 0x4, scoped, tag = 'scoped memory for tpu_custom_call.1']
    #allocation9 [shape = 'u8[4096]{0}', space=vmem, size = 0x1000, scoped, tag = 'output window, operand 0, single buffered']
    %13 = vsyncpa [#allocation5], 0
    %14 = vsyncpa [#allocation8], 0
    %15 = vsyncpa [#allocation6], 0
    // Predicated region
    $region2: #{tpu_custom_call.1} parent=1 // pred_check
      _
    $region3: #{tpu_custom_call.1} parent=1 // pred_check_branch
      %17 = sbr.rel (0) target = $region5
    $region4: #{tpu_custom_call.1} parent=1 // pred_region
      _
    $region5: #{tpu_custom_call.1} parent=1 // pred_fallthru
      _
    // Predicated region
    $region6: #{tpu_custom_call.1} parent=1 // pred_check
      _
    $region7: #{tpu_custom_call.1} parent=1 // pred_check_branch
      %19 = sbr.rel (0) target = $region9
    $region8: #{tpu_custom_call.1} parent=1 // pred_region
      _
    $region9: #{tpu_custom_call.1} parent=1 // pred_fallthru
      _
    // Predicated region
    $region10: #{tpu_custom_call.1} parent=1 // pred_check
      _
    $region11: #{tpu_custom_call.1} parent=1 // pred_check_branch
      %21 = sbr.rel (0) target = $region13
    $region12: #{tpu_custom_call.1} parent=1 // pred_region
      _
    $region13: #{tpu_custom_call.1} parent=1 // pred_fallthru
      _
    // Predicated region
    $region14: #{tpu_custom_call.1} parent=1 // pred_check
      _
    $region15: #{tpu_custom_call.1} parent=1 // pred_check_branch
      %23 = sbr.rel (0) target = $region17
    $region16: #{tpu_custom_call.1} parent=1 // pred_region
      _
    $region17: #{tpu_custom_call.1} parent=1 // pred_fallthru
      _
    // Predicated region
    $region18: #{tpu_custom_call.1} parent=1 // pred_check
      _
    $region19: #{tpu_custom_call.1} parent=1 // pred_check_branch
      %25 = sbr.rel (0) target = $region21
    $region20: #{tpu_custom_call.1} parent=1 // pred_region
      %s27 = ssub.s32 4096, 4096
      %28 = vsyncadd [#allocation5], %s27
      %s29 = sshll.u32 [#allocation4], 4
      %s30 = int_to_ptr.vmem [resolvable:$true] %s29
      %35 = dma.hbm_to_vmem [thread:$0]  %s4, 4096, %s30, [#allocation5], 256, 256, 16
    $region21: #{tpu_custom_call.1} parent=1 // pred_fallthru
      _
    // Predicated region
    $region22: #{tpu_custom_call.1} parent=1 // pred_check
      _
    $region23: #{tpu_custom_call.1} parent=1 // pred_check_branch
      %37 = sbr.rel (0) target = $region25
    $region24: #{tpu_custom_call.1} parent=1 // pred_region
      %s39 = ssub.s32 4096, 4096
      %40 = vsyncadd [#allocation8], %s39
      %s41 = sshll.u32 [#allocation7], 4
      %s42 = int_to_ptr.vmem [resolvable:$true] %s41
      %47 = dma.hbm_to_vmem [thread:$0]  %s5, 4096, %s42, [#allocation8], 256, 256, 16
    $region25: #{tpu_custom_call.1} parent=1 // pred_fallthru
      _
    // Predicated region
    $region26: #{tpu_custom_call.1} parent=1 // pred_check
      _
    $region27: #{tpu_custom_call.1} parent=1 // pred_check_branch
      %49 = sbr.rel (0) target = $region29
    $region28: #{tpu_custom_call.1} parent=1 // pred_region
      _
    $region29: #{tpu_custom_call.1} parent=1 // pred_fallthru
      _
    // Predicated region
    $region30: #{tpu_custom_call.1} parent=1 // pred_check
      _
    $region31: #{tpu_custom_call.1} parent=1 // pred_check_branch
      %51 = sbr.rel (0) target = $region33
    $region32: #{tpu_custom_call.1} parent=1 // pred_region
      _
    $region33: #{tpu_custom_call.1} parent=1 // pred_fallthru
      _
    // Predicated region
    $region34: #{tpu_custom_call.1} parent=1 // pred_check
      _
    $region35: #{tpu_custom_call.1} parent=1 // pred_check_branch
      %53 = sbr.rel (0) target = $region37
    $region36: #{tpu_custom_call.1} parent=1 // pred_region
      %54 = dma.done [#allocation5], 4096
    $region37: #{tpu_custom_call.1} parent=1 // pred_fallthru
      _
    // Predicated region
    $region38: #{tpu_custom_call.1} parent=1 // pred_check
      _
    $region39: #{tpu_custom_call.1} parent=1 // pred_check_branch
      %56 = sbr.rel (0) target = $region41
    $region40: #{tpu_custom_call.1} parent=1 // pred_region
      %57 = dma.done [#allocation8], 4096
    $region41: #{tpu_custom_call.1} parent=1 // pred_fallthru
      _
    %p58 = scmp.eq.s32.totalorder 0, 0
    // Predicated region
    $region42: #{tpu_custom_call.1} parent=1 // pred_check
      %p59 = pneg %p58
    $region43: #{tpu_custom_call.1} parent=1 // pred_check_branch
      %61 = sbr.rel (%p59) target = $region45
    $region44: #{tpu_custom_call.1} parent=1 // pred_region
      %v62 = vld [vmem:[%s2] sm:$0xff]
      %v63 = vld [vmem:[#allocation4] sm:$0xff]
      %v64 = vld [vmem:[#allocation4 + $0x8] sm:$0xff]
      %v65 = vld [vmem:[#allocation4 + $0x10] sm:$0xff]
      %v66 = vld [vmem:[#allocation4 + $0x18] sm:$0xff]
      %v67 = vld [vmem:[#allocation4 + $0x20] sm:$0xff]
      %v68 = vld [vmem:[#allocation4 + $0x28] sm:$0xff]
      %v69 = vld [vmem:[#allocation4 + $0x30] sm:$0xff]
      %v70 = vld [vmem:[#allocation4 + $0x38] sm:$0xff]
      %v71 = vld [vmem:[#allocation4 + $0x40] sm:$0xff]
      %v72 = vld [vmem:[#allocation4 + $0x48] sm:$0xff]
      %v73 = vld [vmem:[#allocation4 + $0x50] sm:$0xff]
      %v74 = vld [vmem:[#allocation4 + $0x58] sm:$0xff]
      %v75 = vld [vmem:[#allocation4 + $0x60] sm:$0xff]
      %v76 = vld [vmem:[#allocation4 + $0x68] sm:$0xff]
      %v77 = vld [vmem:[#allocation4 + $0x70] sm:$0xff]
      %v78 = vld [vmem:[#allocation4 + $0x78] sm:$0xff]
      %v79 = vld [vmem:[#allocation4 + $0x80] sm:$0xff]
      %v80 = vld [vmem:[#allocation4 + $0x88] sm:$0xff]
      %v81 = vld [vmem:[#allocation4 + $0x90] sm:$0xff]
      %v82 = vld [vmem:[#allocation4 + $0x98] sm:$0xff]
      %v83 = vld [vmem:[#allocation4 + $0xa0] sm:$0xff]
      %v84 = vld [vmem:[#allocation4 + $0xa8] sm:$0xff]
      %v85 = vld [vmem:[#allocation4 + $0xb0] sm:$0xff]
      %v86 = vld [vmem:[#allocation4 + $0xb8] sm:$0xff]
      %v87 = vld [vmem:[#allocation4 + $0xc0] sm:$0xff]
      %v88 = vld [vmem:[#allocation4 + $0xc8] sm:$0xff]
      %v89 = vld [vmem:[#allocation4 + $0xd0] sm:$0xff]
      %v90 = vld [vmem:[#allocation4 + $0xd8] sm:$0xff]
      %v91 = vld [vmem:[#allocation4 + $0xe0] sm:$0xff]
      %v92 = vld [vmem:[#allocation4 + $0xe8] sm:$0xff]
      %v93 = vld [vmem:[#allocation4 + $0xf0] sm:$0xff]
      %v94 = vld [vmem:[#allocation4 + $0xf8] sm:$0xff]
      %95 = vmatprep.subr.mxu0 %v64
      %96 = vmatpush1.msra.mxu0 %v63
      %97 = vmatprep.subr.mxu0 %v66
      %98 = vmatpush1.msra.mxu0 %v65
      %99 = vmatprep.subr.mxu0 %v68
      %100 = vmatpush1.msra.mxu0 %v67
      %101 = vmatprep.subr.mxu0 %v70
      %102 = vmatpush1.msra.mxu0 %v69
      %103 = vmatprep.subr.mxu0 %v72
      %104 = vmatpush1.msra.mxu0 %v71
      %105 = vmatprep.subr.mxu0 %v74
      %106 = vmatpush1.msra.mxu0 %v73
      %107 = vmatprep.subr.mxu0 %v76
      %108 = vmatpush1.msra.mxu0 %v75
      %109 = vmatprep.subr.mxu0 %v78
      %110 = vmatpush1.msra.mxu0 %v77
      %111 = vmatprep.subr.mxu0 %v80
      %112 = vmatpush1.msra.mxu0 %v79
      %113 = vmatprep.subr.mxu0 %v82
      %114 = vmatpush1.msra.mxu0 %v81
      %115 = vmatprep.subr.mxu0 %v84
      %116 = vmatpush1.msra.mxu0 %v83
      %117 = vmatprep.subr.mxu0 %v86
      %118 = vmatpush1.msra.mxu0 %v85
      %119 = vmatprep.subr.mxu0 %v88
      %120 = vmatpush1.msra.mxu0 %v87
      %121 = vmatprep.subr.mxu0 %v90
      %122 = vmatpush1.msra.mxu0 %v89
      %123 = vmatprep.subr.mxu0 %v92
      %124 = vmatpush1.msra.mxu0 %v91
      %125 = vmatprep.subr.mxu0 %v94
      %126 = vmatpush1.msra.mxu0 %v93
      %127 = vmatprep.subr.mxu0 0.0
      %128 = vmatpush1.msra.mxu0 0.0
      %129 = vmatprep.subr.mxu0 0.0
      %130 = vmatpush1.msra.mxu0 0.0
      %131 = vmatprep.subr.mxu0 0.0
      %132 = vmatpush1.msra.mxu0 0.0
      %133 = vmatprep.subr.mxu0 0.0
      %134 = vmatpush1.msra.mxu0 0.0
      %135 = vmatprep.subr.mxu0 0.0
      %136 = vmatpush1.msra.mxu0 0.0
      %137 = vmatprep.subr.mxu0 0.0
      %138 = vmatpush1.msra.mxu0 0.0
      %139 = vmatprep.subr.mxu0 0.0
      %140 = vmatpush1.msra.mxu0 0.0
      %141 = vmatprep.subr.mxu0 0.0
      %142 = vmatpush1.msra.mxu0 0.0
      %143 = vmatprep.subr.mxu0 0.0
      %144 = vmatpush1.msra.mxu0 0.0
      %145 = vmatprep.subr.mxu0 0.0
      %146 = vmatpush1.msra.mxu0 0.0
      %147 = vmatprep.subr.mxu0 0.0
      %148 = vmatpush1.msra.mxu0 0.0
      %149 = vmatprep.subr.mxu0 0.0
      %150 = vmatpush1.msra.mxu0 0.0
      %151 = vmatprep.subr.mxu0 0.0
      %152 = vmatpush1.msra.mxu0 0.0
      %153 = vmatprep.subr.mxu0 0.0
      %154 = vmatpush1.msra.mxu0 0.0
      %155 = vmatprep.subr.mxu0 0.0
      %156 = vmatpush1.msra.mxu0 0.0
      %157 = vmatprep.subr.mxu0 0.0
      %158 = vmatpush1.msra.mxu0 0.0
      %159 = vmatprep.mubr.f32.mxu0 0.0
      %160 = vmatmul.mubr.f32.gmra.mrb[0].mxu0 %v62
      %v161 = vpop.f32.mrb[0].mxu0
      %v162 = vadd.f32 0.0, %v161
      %v163 = vpop.f32.mrb[0].mxu0
      %v164 = vadd.f32 0.0, %v163
      %165 = vdwg.mxu0
      %166 = vst [vmem:[#allocation2] sm:$0xff] %v162
      %167 = vst [vmem:[#allocation2 + $0x8] sm:$0xff] %v164
      %v168 = vld [vmem:[#allocation7] sm:$0xff]
      %v169 = vld [vmem:[#allocation7 + $0x8] sm:$0xff]
      %v170 = vld [vmem:[#allocation7 + $0x10] sm:$0xff]
      %v171 = vld [vmem:[#allocation7 + $0x18] sm:$0xff]
      %v172 = vld [vmem:[#allocation7 + $0x20] sm:$0xff]
      %v173 = vld [vmem:[#allocation7 + $0x28] sm:$0xff]
      %v174 = vld [vmem:[#allocation7 + $0x30] sm:$0xff]
      %v175 = vld [vmem:[#allocation7 + $0x38] sm:$0xff]
      %v176 = vld [vmem:[#allocation7 + $0x40] sm:$0xff]
      %v177 = vld [vmem:[#allocation7 + $0x48] sm:$0xff]
      %v178 = vld [vmem:[#allocation7 + $0x50] sm:$0xff]
      %v179 = vld [vmem:[#allocation7 + $0x58] sm:$0xff]
      %v180 = vld [vmem:[#allocation7 + $0x60] sm:$0xff]
      %v181 = vld [vmem:[#allocation7 + $0x68] sm:$0xff]
      %v182 = vld [vmem:[#allocation7 + $0x70] sm:$0xff]
      %v183 = vld [vmem:[#allocation7 + $0x78] sm:$0xff]
      %v184 = vld [vmem:[#allocation7 + $0x80] sm:$0xff]
      %v185 = vld [vmem:[#allocation7 + $0x88] sm:$0xff]
      %v186 = vld [vmem:[#allocation7 + $0x90] sm:$0xff]
      %v187 = vld [vmem:[#allocation7 + $0x98] sm:$0xff]
      %v188 = vld [vmem:[#allocation7 + $0xa0] sm:$0xff]
      %v189 = vld [vmem:[#allocation7 + $0xa8] sm:$0xff]
      %v190 = vld [vmem:[#allocation7 + $0xb0] sm:$0xff]
      %v191 = vld [vmem:[#allocation7 + $0xb8] sm:$0xff]
      %v192 = vld [vmem:[#allocation7 + $0xc0] sm:$0xff]
      %v193 = vld [vmem:[#allocation7 + $0xc8] sm:$0xff]
      %v194 = vld [vmem:[#allocation7 + $0xd0] sm:$0xff]
      %v195 = vld [vmem:[#allocation7 + $0xd8] sm:$0xff]
      %v196 = vld [vmem:[#allocation7 + $0xe0] sm:$0xff]
      %v197 = vld [vmem:[#allocation7 + $0xe8] sm:$0xff]
      %v198 = vld [vmem:[#allocation7 + $0xf0] sm:$0xff]
      %v199 = vld [vmem:[#allocation7 + $0xf8] sm:$0xff]
      %200 = vmatprep.subr.mxu0 %v169
      %201 = vmatpush1.msra.mxu0 %v168
      %202 = vmatprep.subr.mxu0 %v171
      %203 = vmatpush1.msra.mxu0 %v170
      %204 = vmatprep.subr.mxu0 %v173
      %205 = vmatpush1.msra.mxu0 %v172
      %206 = vmatprep.subr.mxu0 %v175
      %207 = vmatpush1.msra.mxu0 %v174
      %208 = vmatprep.subr.mxu0 %v177
      %209 = vmatpush1.msra.mxu0 %v176
      %210 = vmatprep.subr.mxu0 %v179
      %211 = vmatpush1.msra.mxu0 %v178
      %212 = vmatprep.subr.mxu0 %v181
      %213 = vmatpush1.msra.mxu0 %v180
      %214 = vmatprep.subr.mxu0 %v183
      %215 = vmatpush1.msra.mxu0 %v182
      %216 = vmatprep.subr.mxu0 %v185
      %217 = vmatpush1.msra.mxu0 %v184
      %218 = vmatprep.subr.mxu0 %v187
      %219 = vmatpush1.msra.mxu0 %v186
      %220 = vmatprep.subr.mxu0 %v189
      %221 = vmatpush1.msra.mxu0 %v188
      %222 = vmatprep.subr.mxu0 %v191
      %223 = vmatpush1.msra.mxu0 %v190
      %224 = vmatprep.subr.mxu0 %v193
      %225 = vmatpush1.msra.mxu0 %v192
      %226 = vmatprep.subr.mxu0 %v195
      %227 = vmatpush1.msra.mxu0 %v194
      %228 = vmatprep.subr.mxu0 %v197
      %229 = vmatpush1.msra.mxu0 %v196
      %230 = vmatprep.subr.mxu0 %v199
      %231 = vmatpush1.msra.mxu0 %v198
      %232 = vmatprep.subr.mxu0 0.0
      %233 = vmatpush1.msra.mxu0 0.0
      %234 = vmatprep.subr.mxu0 0.0
      %235 = vmatpush1.msra.mxu0 0.0
      %236 = vmatprep.subr.mxu0 0.0
      %237 = vmatpush1.msra.mxu0 0.0
      %238 = vmatprep.subr.mxu0 0.0
      %239 = vmatpush1.msra.mxu0 0.0
      %240 = vmatprep.subr.mxu0 0.0
      %241 = vmatpush1.msra.mxu0 0.0
      %242 = vmatprep.subr.mxu0 0.0
      %243 = vmatpush1.msra.mxu0 0.0
      %244 = vmatprep.subr.mxu0 0.0
      %245 = vmatpush1.msra.mxu0 0.0
      %246 = vmatprep.subr.mxu0 0.0
      %247 = vmatpush1.msra.mxu0 0.0
      %248 = vmatprep.subr.mxu0 0.0
      %249 = vmatpush1.msra.mxu0 0.0
      %250 = vmatprep.subr.mxu0 0.0
      %251 = vmatpush1.msra.mxu0 0.0
      %252 = vmatprep.subr.mxu0 0.0
      %253 = vmatpush1.msra.mxu0 0.0
      %254 = vmatprep.subr.mxu0 0.0
      %255 = vmatpush1.msra.mxu0 0.0
      %256 = vmatprep.subr.mxu0 0.0
      %257 = vmatpush1.msra.mxu0 0.0
      %258 = vmatprep.subr.mxu0 0.0
      %259 = vmatpush1.msra.mxu0 0.0
      %260 = vmatprep.subr.mxu0 0.0
      %261 = vmatpush1.msra.mxu0 0.0
      %262 = vmatprep.subr.mxu0 0.0
      %263 = vmatpush1.msra.mxu0 0.0
      %264 = vmatprep.mubr.f32.mxu0 0.0
      %265 = vmatmul.mubr.f32.gmra.mrb[0].mxu0 %v62
      %v266 = vpop.f32.mrb[0].mxu0
      %v267 = vadd.f32 0.0, %v266
      %v268 = vpop.f32.mrb[0].mxu0
      %v269 = vadd.f32 0.0, %v268
      %270 = vdwg.mxu0
      %271 = vst [vmem:[#allocation2 + $0x10] sm:$0xff] %v267
      %272 = vst [vmem:[#allocation2 + $0x18] sm:$0xff] %v269
      %273 = vst [vmem:[#allocation3] sm:$0xff] 0.0
    $region45: #{tpu_custom_call.1} parent=1 // pred_fallthru
      _
    %v274 = vld [vmem:[%s0] sm:$0xff]
    %v275 = vld [vmem:[%s0 + $0x8] sm:$0xff]
    %v276 = vld [vmem:[%s1] sm:$0xff]
    %v277 = vld [vmem:[%s1 + $0x8] sm:$0xff]
    %v278 = vlaneseq
    %v279 = vand.u32 %v278, 127
    %280 = vset.pattern.permute.xlu0 0
    %281 = vperm.xlu0 %280, %v274
    %v282 = vpop.permute.xlu0 %281
    %283 = vset.pattern.permute.xlu0 0
    %284 = vperm.xlu0 %283, %v275
    %v285 = vpop.permute.xlu0 %284
    %vm286 = vcmp.eq.s32.totalorder %v279, %v282
    %vm287 = vcmp.eq.s32.totalorder %v279, %v285
    %v288 = vadd.s32 %v276, 8
    %v289 = vadd.s32 %v277, 8
    %290 = vset.pattern.permute.xlu0 0
    %291 = vperm.xlu0 %290, %v288
    %v292 = vpop.permute.xlu0 %291
    %293 = vset.pattern.permute.xlu0 0
    %294 = vperm.xlu0 %293, %v289
    %v295 = vpop.permute.xlu0 %294
    %vm296 = vcmp.eq.s32.totalorder %v279, %v292
    %vm297 = vcmp.eq.s32.totalorder %v279, %v295
    %vm298 = vmor %vm286, %vm296
    %vm299 = vmor %vm287, %vm297
    %v300 = vsel %vm298, 1, 0
    %v301 = vsel %vm299, 1, 0
    %v302 = vcvt.s32.f32 %v300
    %v303 = vcvt.s32.f32 %v301
    %v304 = vld [vmem:[#allocation2] sm:$0xff]
    %v305 = vld [vmem:[#allocation2 + $0x8] sm:$0xff]
    %v306 = vld [vmem:[#allocation2 + $0x10] sm:$0xff]
    %v307 = vld [vmem:[#allocation2 + $0x18] sm:$0xff]
    %v308 = vld [vmem:[%s3] sm:$0xff]
    %v309 = vld [vmem:[%s3 + $0x8] sm:$0xff]
    %v310 = vld [vmem:[%s6] sm:$0xff]
    %v311 = vld [vmem:[%s6 + $0x8] sm:$0xff]
    %v312 = vld [vmem:[%s6 + $0x10] sm:$0xff]
    %v313 = vld [vmem:[%s6 + $0x18] sm:$0xff]
    %vm314 = vcmask 130048
    %v316 = vsel %vm314, %v308, 0
    %v319 = vsel %vm314, %v309, 0
    %321 = vmatprep.subr.mxu0 %v311
    %322 = vmatpush1.msra.mxu0 %v310
    %323 = vmatprep.subr.mxu0 %v313
    %324 = vmatpush1.msra.mxu0 %v312
    %325 = vmatprep.subr.mxu0 0.0
    %326 = vmatpush1.msra.mxu0 0.0
    %327 = vmatprep.subr.mxu0 0.0
    %328 = vmatpush1.msra.mxu0 0.0
    %329 = vmatprep.subr.mxu0 0.0
    %330 = vmatpush1.msra.mxu0 0.0
    %331 = vmatprep.subr.mxu0 0.0
    %332 = vmatpush1.msra.mxu0 0.0
    %333 = vmatprep.subr.mxu0 0.0
    %334 = vmatpush1.msra.mxu0 0.0
    %335 = vmatprep.subr.mxu0 0.0
    %336 = vmatpush1.msra.mxu0 0.0
    %337 = vmatprep.subr.mxu0 0.0
    %338 = vmatpush1.msra.mxu0 0.0
    %339 = vmatprep.subr.mxu0 0.0
    %340 = vmatpush1.msra.mxu0 0.0
    %341 = vmatprep.subr.mxu0 0.0
    %342 = vmatpush1.msra.mxu0 0.0
    %343 = vmatprep.subr.mxu0 0.0
    %344 = vmatpush1.msra.mxu0 0.0
    %345 = vmatprep.subr.mxu0 0.0
    %346 = vmatpush1.msra.mxu0 0.0
    %347 = vmatprep.subr.mxu0 0.0
    %348 = vmatpush1.msra.mxu0 0.0
    %349 = vmatprep.subr.mxu0 0.0
    %350 = vmatpush1.msra.mxu0 0.0
    %351 = vmatprep.subr.mxu0 0.0
    %352 = vmatpush1.msra.mxu0 0.0
    %353 = vmatprep.subr.mxu0 0.0
    %354 = vmatpush1.msra.mxu0 0.0
    %355 = vmatprep.subr.mxu0 0.0
    %356 = vmatpush1.msra.mxu0 0.0
    %357 = vmatprep.subr.mxu0 0.0
    %358 = vmatpush1.msra.mxu0 0.0
    %359 = vmatprep.subr.mxu0 0.0
    %360 = vmatpush1.msra.mxu0 0.0
    %361 = vmatprep.subr.mxu0 0.0
    %362 = vmatpush1.msra.mxu0 0.0
    %363 = vmatprep.subr.mxu0 0.0
    %364 = vmatpush1.msra.mxu0 0.0
    %365 = vmatprep.subr.mxu0 0.0
    %366 = vmatpush1.msra.mxu0 0.0
    %367 = vmatprep.subr.mxu0 0.0
    %368 = vmatpush1.msra.mxu0 0.0
    %369 = vmatprep.subr.mxu0 0.0
    %370 = vmatpush1.msra.mxu0 0.0
    %371 = vmatprep.subr.mxu0 0.0
    %372 = vmatpush1.msra.mxu0 0.0
    %373 = vmatprep.subr.mxu0 0.0
    %374 = vmatpush1.msra.mxu0 0.0
    %375 = vmatprep.subr.mxu0 0.0
    %376 = vmatpush1.msra.mxu0 0.0
    %377 = vmatprep.subr.mxu0 0.0
    %378 = vmatpush1.msra.mxu0 0.0
    %379 = vmatprep.subr.mxu0 0.0
    %380 = vmatpush1.msra.mxu0 0.0
    %381 = vmatprep.subr.mxu0 0.0
    %382 = vmatpush1.msra.mxu0 0.0
    %383 = vmatprep.subr.mxu0 0.0
    %384 = vmatpush1.msra.mxu0 0.0
    %385 = vmatprep.mubr.f32.mxu0 0.0
    %386 = vmatmul.mubr.f32.gmra.mrb[0].mxu0 %v316
    %v387 = vpop.f32.mrb[0].mxu0
    %v388 = vadd.f32 0.0, %v387
    %v389 = vpop.f32.mrb[0].mxu0
    %v390 = vadd.f32 0.0, %v389
    %391 = vmatprep.mubr.f32.mxu0 0.0
    %392 = vmatmul.mubr.f32.gmra.mrb[0].mxu0 %v319
    %v393 = vpop.f32.mrb[0].mxu0
    %v394 = vadd.f32 0.0, %v393
    %v395 = vpop.f32.mrb[0].mxu0
    %v396 = vadd.f32 0.0, %v395
    %397 = vdwg.mxu0
    %v399 = vsel %vm314, %v302, 0
    %v402 = vsel %vm314, %v303, 0
    %404 = vmatprep.subr.mxu0 %v305
    %405 = vmatpush1.msra.mxu0 %v304
    %406 = vmatprep.subr.mxu0 %v307
    %407 = vmatpush1.msra.mxu0 %v306
    %408 = vmatprep.subr.mxu0 0.0
    %409 = vmatpush1.msra.mxu0 0.0
    %410 = vmatprep.subr.mxu0 0.0
    %411 = vmatpush1.msra.mxu0 0.0
    %412 = vmatprep.subr.mxu0 0.0
    %413 = vmatpush1.msra.mxu0 0.0
    %414 = vmatprep.subr.mxu0 0.0
    %415 = vmatpush1.msra.mxu0 0.0
    %416 = vmatprep.subr.mxu0 0.0
    %417 = vmatpush1.msra.mxu0 0.0
    %418 = vmatprep.subr.mxu0 0.0
    %419 = vmatpush1.msra.mxu0 0.0
    %420 = vmatprep.subr.mxu0 0.0
    %421 = vmatpush1.msra.mxu0 0.0
    %422 = vmatprep.subr.mxu0 0.0
    %423 = vmatpush1.msra.mxu0 0.0
    %424 = vmatprep.subr.mxu0 0.0
    %425 = vmatpush1.msra.mxu0 0.0
    %426 = vmatprep.subr.mxu0 0.0
    %427 = vmatpush1.msra.mxu0 0.0
    %428 = vmatprep.subr.mxu0 0.0
    %429 = vmatpush1.msra.mxu0 0.0
    %430 = vmatprep.subr.mxu0 0.0
    %431 = vmatpush1.msra.mxu0 0.0
    %432 = vmatprep.subr.mxu0 0.0
    %433 = vmatpush1.msra.mxu0 0.0
    %434 = vmatprep.subr.mxu0 0.0
    %435 = vmatpush1.msra.mxu0 0.0
    %436 = vmatprep.subr.mxu0 0.0
    %437 = vmatpush1.msra.mxu0 0.0
    %438 = vmatprep.subr.mxu0 0.0
    %439 = vmatpush1.msra.mxu0 0.0
    %440 = vmatprep.subr.mxu0 0.0
    %441 = vmatpush1.msra.mxu0 0.0
    %442 = vmatprep.subr.mxu0 0.0
    %443 = vmatpush1.msra.mxu0 0.0
    %444 = vmatprep.subr.mxu0 0.0
    %445 = vmatpush1.msra.mxu0 0.0
    %446 = vmatprep.subr.mxu0 0.0
    %447 = vmatpush1.msra.mxu0 0.0
    %448 = vmatprep.subr.mxu0 0.0
    %449 = vmatpush1.msra.mxu0 0.0
    %450 = vmatprep.subr.mxu0 0.0
    %451 = vmatpush1.msra.mxu0 0.0
    %452 = vmatprep.subr.mxu0 0.0
    %453 = vmatpush1.msra.mxu0 0.0
    %454 = vmatprep.subr.mxu0 0.0
    %455 = vmatpush1.msra.mxu0 0.0
    %456 = vmatprep.subr.mxu0 0.0
    %457 = vmatpush1.msra.mxu0 0.0
    %458 = vmatprep.subr.mxu0 0.0
    %459 = vmatpush1.msra.mxu0 0.0
    %460 = vmatprep.subr.mxu0 0.0
    %461 = vmatpush1.msra.mxu0 0.0
    %462 = vmatprep.subr.mxu0 0.0
    %463 = vmatpush1.msra.mxu0 0.0
    %464 = vmatprep.subr.mxu0 0.0
    %465 = vmatpush1.msra.mxu0 0.0
    %466 = vmatprep.subr.mxu0 0.0
    %467 = vmatpush1.msra.mxu0 0.0
    %468 = vmatprep.mubr.f32.mxu0 0.0
    %469 = vmatmul.mubr.f32.gmra.mrb[0].mxu0 %v399
    %v470 = vpop.f32.mrb[0].mxu0
    %v471 = vadd.f32 %v388, %v470
    %v472 = vpop.f32.mrb[0].mxu0
    %v473 = vadd.f32 %v390, %v472
    %474 = vmatprep.mubr.f32.mxu0 0.0
    %475 = vmatmul.mubr.f32.gmra.mrb[0].mxu0 %v402
    %v476 = vpop.f32.mrb[0].mxu0
    %v477 = vadd.f32 %v394, %v476
    %v478 = vpop.f32.mrb[0].mxu0
    %v479 = vadd.f32 %v396, %v478
    %480 = vdwg.mxu0
    %v481 = vld [vmem:[%s7] sm:$0x3]
    %v483 = vlaneseq
    %v484 = vshrl.u32 %v483, 7
    %v485 = vsub.s32 0, %v484
    %v486 = vrot.slane %v481, %v485
    %v487 = vlaneseq
    %v488 = vshrl.u32 %v487, 7
    %v489 = vsub.s32 1, %v488
    %v490 = vrot.slane %v481, %v489
    %v493 = vadd.f32 %v471, %v486
    %v494 = vadd.f32 %v473, %v490
    %v495 = vadd.f32 %v477, %v486
    %v496 = vadd.f32 %v479, %v490
    %v497 = vxor.u32 %v493, 2147483648
    %v498 = vxor.u32 %v495, 2147483648
    %v499 = vmul.f32 %v497, 1.442695
    %v500 = vpow.pop %v499
    %v501 = vmul.f32 %v498, 1.442695
    %v502 = vpow.pop %v501
    %v503 = vadd.f32 %v500, 1.0
    %v504 = vadd.f32 %v502, 1.0
    %v505 = vrcp.pop %v503
    %v506 = vmul.f32 1.0, %v505
    %v507 = vrcp.pop %v504
    %v508 = vmul.f32 1.0, %v507
    %v509 = vmax.f32 %v494, 0.0
    %v510 = vmax.f32 %v496, 0.0
    %vm511 = vcmp.ne.f32.partialorder %v494, %v494
    %vm512 = vcmp.ne.f32.partialorder %v496, %v496
    %v513 = vadd.f32 %v494, 0.0
    %v514 = vadd.f32 %v496, 0.0
    %v515 = vand.u32 2147483647, %v494
    %v516 = vand.u32 2147483647, %v496
    %v517 = vsub.f32 0.0, %v515
    %v518 = vsub.f32 0.0, %v516
    %v519 = vmul.f32 %v517, 1.442695
    %v520 = vpow.pop %v519
    %v521 = vmul.f32 %v518, 1.442695
    %v522 = vpow.pop %v521
    %v523 = vadd.f32 %v520, 1.0
    %v524 = vlog2.pop %v523
    %v525 = vmul.f32 %v524, 0.6931472
    %v526 = vmul.f32 -0.5, %v520
    %v527 = vadd.f32 %v526, 1.0
    %v528 = vmul.f32 %v527, %v520
    %v529 = vand.u32 2147483647, %v520
    %vm530 = vcmp.lt.f32.partialorder %v529, 0.0004427343
    %v531 = vsel %vm530, %v528, %v525
    %v532 = vadd.f32 %v522, 1.0
    %v533 = vlog2.pop %v532
    %v534 = vmul.f32 %v533, 0.6931472
    %v535 = vmul.f32 -0.5, %v522
    %v536 = vadd.f32 %v535, 1.0
    %v537 = vmul.f32 %v536, %v522
    %v538 = vand.u32 2147483647, %v522
    %vm539 = vcmp.lt.f32.partialorder %v538, 0.0004427343
    %v540 = vsel %vm539, %v537, %v534
    %v541 = vadd.f32 %v509, %v531
    %v542 = vadd.f32 %v510, %v540
    %v543 = vsel %vm511, %v513, %v541
    %v544 = vsel %vm512, %v514, %v542
    %v545 = vmul.f32 %v506, %v543
    %v546 = vmul.f32 %v508, %v544
    %547 = vset.pattern.permute.xlu0 0
    %548 = vperm.xlu0 %547, %v276
    %v549 = vpop.permute.xlu0 %548
    %550 = vset.pattern.permute.xlu0 0
    %551 = vperm.xlu0 %550, %v277
    %v552 = vpop.permute.xlu0 %551
    %vm553 = vcmp.eq.s32.totalorder %v279, %v549
    %vm554 = vcmp.eq.s32.totalorder %v279, %v552
    %v555 = vsel %vm553, 1, 0
    %v556 = vsel %vm554, 1, 0
    %v557 = vcvt.s32.f32 %v555
    %v558 = vcvt.s32.f32 %v556
    %v559 = vld [vmem:[#allocation3] sm:$0xff]
    %560 = vxpose.xlu0.b32.start [1/16] %v557, 128
    %561 = vxpose.xlu0.b32.cont [2/16] %v558, 128
    %562 = vxpose.xlu0.b32.cont [3/16] 0.0, 128
    %563 = vxpose.xlu0.b32.cont [4/16] 0.0, 128
    %564 = vxpose.xlu0.b32.cont [5/16] 0.0, 128
    %565 = vxpose.xlu0.b32.cont [6/16] 0.0, 128
    %566 = vxpose.xlu0.b32.cont [7/16] 0.0, 128
    %567 = vxpose.xlu0.b32.cont [8/16] 0.0, 128
    %568 = vxpose.xlu0.b32.cont [9/16] 0.0, 128
    %569 = vxpose.xlu0.b32.cont [10/16] 0.0, 128
    %570 = vxpose.xlu0.b32.cont [11/16] 0.0, 128
    %571 = vxpose.xlu0.b32.cont [12/16] 0.0, 128
    %572 = vxpose.xlu0.b32.cont [13/16] 0.0, 128
    %573 = vxpose.xlu0.b32.cont [14/16] 0.0, 128
    %574 = vxpose.xlu0.b32.cont [15/16] 0.0, 128
    %575 = vxpose.xlu0.b32.end [16/16] 0.0, 128
    %v576 = vpop.trf.xlu0
    %v577 = vpop.trf.xlu0
    %v578 = vpop.trf.xlu0
    %v579 = vpop.trf.xlu0
    %v580 = vpop.trf.xlu0
    %v581 = vpop.trf.xlu0
    %v582 = vpop.trf.xlu0
    %v583 = vpop.trf.xlu0
    %v584 = vpop.trf.xlu0
    %v585 = vpop.trf.xlu0
    %v586 = vpop.trf.xlu0
    %v587 = vpop.trf.xlu0
    %v588 = vpop.trf.xlu0
    %v589 = vpop.trf.xlu0
    %v590 = vpop.trf.xlu0
    %v591 = vpop.trf.xlu0
    %v593 = vsel %vm314, %v576, 0
    %595 = vmatprep.subr.mxu0 0.0
    %596 = vmatpush1.msra.mxu0 %v545
    %597 = vmatprep.subr.mxu0 0.0
    %598 = vmatpush1.msra.mxu0 %v546
    %599 = vmatprep.subr.mxu0 0.0
    %600 = vmatpush1.msra.mxu0 0.0
    %601 = vmatprep.subr.mxu0 0.0
    %602 = vmatpush1.msra.mxu0 0.0
    %603 = vmatprep.subr.mxu0 0.0
    %604 = vmatpush1.msra.mxu0 0.0
    %605 = vmatprep.subr.mxu0 0.0
    %606 = vmatpush1.msra.mxu0 0.0
    %607 = vmatprep.subr.mxu0 0.0
    %608 = vmatpush1.msra.mxu0 0.0
    %609 = vmatprep.subr.mxu0 0.0
    %610 = vmatpush1.msra.mxu0 0.0
    %611 = vmatprep.subr.mxu0 0.0
    %612 = vmatpush1.msra.mxu0 0.0
    %613 = vmatprep.subr.mxu0 0.0
    %614 = vmatpush1.msra.mxu0 0.0
    %615 = vmatprep.subr.mxu0 0.0
    %616 = vmatpush1.msra.mxu0 0.0
    %617 = vmatprep.subr.mxu0 0.0
    %618 = vmatpush1.msra.mxu0 0.0
    %619 = vmatprep.subr.mxu0 0.0
    %620 = vmatpush1.msra.mxu0 0.0
    %621 = vmatprep.subr.mxu0 0.0
    %622 = vmatpush1.msra.mxu0 0.0
    %623 = vmatprep.subr.mxu0 0.0
    %624 = vmatpush1.msra.mxu0 0.0
    %625 = vmatprep.subr.mxu0 0.0
    %626 = vmatpush1.msra.mxu0 0.0
    %627 = vmatprep.subr.mxu0 0.0
    %628 = vmatpush1.msra.mxu0 0.0
    %629 = vmatprep.subr.mxu0 0.0
    %630 = vmatpush1.msra.mxu0 0.0
    %631 = vmatprep.subr.mxu0 0.0
    %632 = vmatpush1.msra.mxu0 0.0
    %633 = vmatprep.subr.mxu0 0.0
    %634 = vmatpush1.msra.mxu0 0.0
    %635 = vmatprep.subr.mxu0 0.0
    %636 = vmatpush1.msra.mxu0 0.0
    %637 = vmatprep.subr.mxu0 0.0
    %638 = vmatpush1.msra.mxu0 0.0
    %639 = vmatprep.subr.mxu0 0.0
    %640 = vmatpush1.msra.mxu0 0.0
    %641 = vmatprep.subr.mxu0 0.0
    %642 = vmatpush1.msra.mxu0 0.0
    %643 = vmatprep.subr.mxu0 0.0
    %644 = vmatpush1.msra.mxu0 0.0
    %645 = vmatprep.subr.mxu0 0.0
    %646 = vmatpush1.msra.mxu0 0.0
    %647 = vmatprep.subr.mxu0 0.0
    %648 = vmatpush1.msra.mxu0 0.0
    %649 = vmatprep.subr.mxu0 0.0
    %650 = vmatpush1.msra.mxu0 0.0
    %651 = vmatprep.subr.mxu0 0.0
    %652 = vmatpush1.msra.mxu0 0.0
    %653 = vmatprep.subr.mxu0 0.0
    %654 = vmatpush1.msra.mxu0 0.0
    %655 = vmatprep.subr.mxu0 0.0
    %656 = vmatpush1.msra.mxu0 0.0
    %657 = vmatprep.subr.mxu0 0.0
    %658 = vmatpush1.msra.mxu0 0.0
    %659 = vmatprep.mubr.f32.mxu0 0.0
    %660 = vmatmul.mubr.f32.gmra.mrb[0].mxu0 %v593
    %v661 = vpop.f32.mrb[0].mxu0
    %v662 = vadd.f32 0.0, %v661
    %v663 = vpop.f32.mrb[0].mxu0
    %664 = vdwg.mxu0
    %v665 = vadd.f32 %v559, %v662
    %666 = vst [vmem:[#allocation3] sm:$0xff] %v665
    // Predicated region
    $region46: #{tpu_custom_call.1} parent=1 // pred_check
      %p667 = pneg %p58
    $region47: #{tpu_custom_call.1} parent=1 // pred_check_branch
      %669 = sbr.rel (%p667) target = $region49
    $region48: #{tpu_custom_call.1} parent=1 // pred_region
      %v670 = vld [vmem:[%s2] sm:$0xff]
      %v671 = vld [vmem:[#allocation3] sm:$0xff]
      %v672 = vadd.f32 %v670, %v671
      %v673 = vmax.f32 %v672, 0.0
      %vm674 = vcmp.ne.f32.partialorder %v672, %v672
      %v675 = vadd.f32 %v672, 0.0
      %v676 = vand.u32 2147483647, %v672
      %v677 = vsub.f32 0.0, %v676
      %v678 = vmul.f32 %v677, 1.442695
      %v679 = vpow.pop %v678
      %v680 = vadd.f32 %v679, 1.0
      %v681 = vlog2.pop %v680
      %v682 = vmul.f32 %v681, 0.6931472
      %v683 = vmul.f32 -0.5, %v679
      %v684 = vadd.f32 %v683, 1.0
      %v685 = vmul.f32 %v684, %v679
      %v686 = vand.u32 2147483647, %v679
      %vm687 = vcmp.lt.f32.partialorder %v686, 0.0004427343
      %v688 = vsel %vm687, %v685, %v682
      %v689 = vadd.f32 %v673, %v688
      %v690 = vsel %vm674, %v675, %v689
      %691 = vst [vmem:[#allocation9] sm:$0xff] %v690
    $region49: #{tpu_custom_call.1} parent=1 // pred_fallthru
      _
    // Predicated region
    $region50: #{tpu_custom_call.1} parent=1 // pred_check
      _
    $region51: #{tpu_custom_call.1} parent=1 // pred_check_branch
      %693 = sbr.rel (0) target = $region53
    $region52: #{tpu_custom_call.1} parent=1 // pred_region
      %s695 = ssub.s32 128, 128
      %696 = vsyncadd [#allocation6], %s695
      %s698 = sshll.u32 [#allocation9], 4
      %s699 = int_to_ptr.vmem [resolvable:$true] %s698
      %701 = dma.vmem_to_hbm [thread:$0]  %s699, 128, %s8, [#allocation6]
    $region53: #{tpu_custom_call.1} parent=1 // pred_fallthru
      _
    // Predicated region
    $region54: #{tpu_custom_call.1} parent=1 // pred_check
      _
    $region55: #{tpu_custom_call.1} parent=1 // pred_check_branch
      %703 = sbr.rel (0) target = $region57
    $region56: #{tpu_custom_call.1} parent=1 // pred_region
      %704 = dma.done [#allocation6], 128
    $region57: #{tpu_custom_call.1} parent=1 // pred_fallthru
      _
    %705 = vsyncpa [#allocation5], 1
    %706 = vsyncpa [#allocation8], 1
    %707 = vsyncpa [#allocation6], 1

</llo_original>
